<compile_context>
chip_gen: v5e
topology: v5e:2x2
jax: 0.10.0
libtpu: 0.0.40
codegen_flags: <defaults>
</compile_context>

<pallas_src>
import functools
import math

import jax
import jax.numpy as jnp
from jax.experimental import pallas as pl
from jax.experimental.pallas import tpu as pltpu


def _patch_merge_kernel(x_ref, we_ref, wo_ref, bias_ref, o_ref, *, eps, inv_4c):
    """Fused 2x2 merge + LayerNorm + Linear on a tile of image row-pairs.

    x_ref   : (TR, 2, Wh, 2C)  dim1 = [even image row, odd image row]; the last
                               dim packs two horizontally adjacent pixels.
    we_ref  : (2C, 2C)  gamma-folded weight rows for the even-row half [x0 | x2]
    wo_ref  : (2C, 2C)  gamma-folded weight rows for the odd-row half  [x1 | x3]
    bias_ref: (1, 2C)   beta @ W^T  (f32)
    o_ref   : (TR*Wh, 2C)
    """
    xb = x_ref[...]                                     # (TR, 2, Wh, 2C)
    tr, _, wh, c2 = xb.shape
    # TODO(synk): when Wh % 8 != 0 this (TR, Wh, 2C) -> (TR*Wh, 2C) collapse
    # costs a VMEM sublane relayout; keep the tile 3-D and contract with a 3-D
    # dot_general once Mosaic supports a non-batched 3-D lhs.
    even = xb[:, 0].reshape(tr * wh, c2).astype(jnp.float32)   # [x0 | x2]
    odd = xb[:, 1].reshape(tr * wh, c2).astype(jnp.float32)    # [x1 | x3]

    # Single-pass LayerNorm statistics over the full 4C channels (both halves).
    s = jnp.sum(even, axis=-1, keepdims=True) + jnp.sum(odd, axis=-1, keepdims=True)
    ss = (jnp.sum(even * even, axis=-1, keepdims=True)
          + jnp.sum(odd * odd, axis=-1, keepdims=True))
    mean = s * inv_4c
    var = jnp.maximum(ss * inv_4c - mean * mean, 0.0)
    inv = jax.lax.rsqrt(var + eps)                      # (TR*Wh, 1) per-token scale

    # gamma is folded into the weights; rsqrt is a per-token scalar so it is
    # factored out of the contraction and applied once on the 2C-wide result.
    we = we_ref[...]
    wo = wo_ref[...]
    acc = jnp.dot((even - mean).astype(we.dtype), we,
                  preferred_element_type=jnp.float32)
    acc = acc + jnp.dot((odd - mean).astype(wo.dtype), wo,
                        preferred_element_type=jnp.float32)
    o_ref[...] = (acc * inv + bias_ref[...]).astype(o_ref.dtype)


def prepare_patch_merging_params(gamma, beta, weight):
    """One-time parameter prep (hoisted out of the per-call forward).

    gamma, beta : (4C,)    LayerNorm affine params (torch channel order [x0,x1,x2,x3])
    weight      : (2C, 4C) nn.Linear(4C, 2C, bias=False).weight (PyTorch layout)

    Folds the LayerNorm affine into the reduction weight (in f32):
        w'   = gamma[:, None] * weight.T   (4C, 2C)
        bias = beta @ weight.T             (2C,)   kept in f32
    and splits w' into the rows consumed by the even image row ([x0 | x2]) and
    the odd image row ([x1 | x3]) so the kernel never concatenates channels.

    Returns (w_even (2C,2C), w_odd (2C,2C), bias (1,2C)).  The weight halves are
    cast back to weight.dtype (ship bf16 for the bf16-native MXU); bias stays f32.
    """
    four_c = gamma.shape[-1]
    C = four_c // 4
    g = gamma.astype(jnp.float32)
    b = beta.astype(jnp.float32)
    w_t = weight.astype(jnp.float32).T                  # (4C, 2C), torch row order
    w_fold = g[:, None] * w_t                           # gamma folded, f32
    bias = (b @ w_t).reshape(1, 2 * C)                  # f32
    w4 = w_fold.reshape(4, C, 2 * C)                    # rows: [x0, x1, x2, x3]
    w_even = jnp.concatenate([w4[0], w4[2]], axis=0)    # even-row channels [x0 | x2]
    w_odd = jnp.concatenate([w4[1], w4[3]], axis=0)     # odd-row channels  [x1 | x3]
    return w_even.astype(weight.dtype), w_odd.astype(weight.dtype), bias


def _select_tile(M, Wh, C, x_itemsize, out_itemsize, w_itemsize):
    """Pick the row-pair tile TR and the Mosaic VMEM limit.

    Generation-aware: 128-MiB VMEM parts (v5e/v6e) get ~108 MiB, 64-MiB parts
    (v7x) ~54 MiB -- always leaving explicit headroom for Mosaic internal
    scratch.  TR is the largest that fits the budget, then shrunk (never below
    ~4 MiB of input bytes per block) so the grid has >= 2 steps (pipelining +
    v7x dual-TensorCore sharding) and ideally ~8.
    """
    try:
        vmem_cap = int(pltpu.get_tpu_info().vmem_capacity_bytes)
    except Exception:
        vmem_cap = 64 * 1024 * 1024                     # conservative fallback (v7x)
    vmem_limit = max(32 << 20, min(vmem_cap - (8 << 20), int(vmem_cap * 0.85)))

    # Constant operands (two weight halves + bias).  Their index_maps never
    # change so they are DMA'd once, but the pipeline still allocates two
    # buffers each.  TODO(synk): single-buffer them (pl.Buffered(1)) once
    # pipeline_mode is plumbed through the top-level pallas_call pipeline.
    const_bytes = 2 * (2 * (2 * C) * (2 * C) * w_itemsize + (2 * C) * 4)

    per_token = (2 * 4 * C * x_itemsize        # input block (double buffered)
                 + 2 * 2 * C * out_itemsize    # output block (double buffered)
                 + 80 * C)                     # f32/bf16 body temporaries
    per_rowpair = per_token * Wh
    block_budget = max(per_rowpair, vmem_limit - const_bytes - (4 << 20))

    unit = 8 // math.gcd(Wh, 8)                # keeps the (TR*Wh, 2C) out block 8-row aligned

    def floor_unit(v):
        return max(unit, (int(v) // unit) * unit)

    tr = floor_unit(block_budget // per_rowpair)            # VMEM-limited maximum
    # Aim for ~8 grid steps, but never shrink below ~4 MiB of input activations.
    in_per_rowpair = 4 * C * Wh * x_itemsize
    tr_min = floor_unit(pl.cdiv(4 << 20, in_per_rowpair))
    tr_steps = floor_unit(pl.cdiv(M, 8))
    tr = min(tr, max(tr_steps, tr_min))
    # Always leave >= 2 steps whenever the work can be split at the sublane unit.
    tr = min(tr, floor_unit(pl.cdiv(M, 2)))
    if tr >= M:
        tr = M                                 # single full-extent block (always legal)
    return tr, vmem_limit


def patch_merging_forward(x, w_even, w_odd, bias, input_resolution, *, eps=1e-5):
    """PatchMerging forward.

    x                   : (B, H*W, C)   (feed bf16 to halve HBM traffic if allowed)
    w_even, w_odd, bias : outputs of prepare_patch_merging_params
    returns             : (B, H/2 * W/2, 2C) in x.dtype
    """
    H, W = input_resolution
    B, L, C = x.shape
    assert L == H * W, "input feature has wrong size"
    assert H % 2 == 0 and W % 2 == 0, f"x size ({H}*{W}) are not even."

    Wh = W // 2
    M = B * (H // 2)               # image row-pairs (grid-tiled axis)
    N = M * Wh                     # merged output tokens

    # Free view (row-major order unchanged): the 2x2 gather happens in VMEM.
    x4 = x.reshape(M, 2, Wh, 2 * C)

    TR, vmem_limit = _select_tile(M, Wh, C, x.dtype.itemsize, x.dtype.itemsize,
                                  w_even.dtype.itemsize)
    grid = (pl.cdiv(M, TR),)       # ragged last block: padded reads, masked writes

    out = pl.pallas_call(
        functools.partial(_patch_merge_kernel, eps=eps, inv_4c=1.0 / (4 * C)),
        out_shape=jax.ShapeDtypeStruct((N, 2 * C), x.dtype),
        grid_spec=pltpu.PrefetchScalarGridSpec(
            num_scalar_prefetch=0,
            grid=grid,
            in_specs=[
                pl.BlockSpec((TR, 2, Wh, 2 * C), lambda i: (i, 0, 0, 0)),  # activations
                pl.BlockSpec((2 * C, 2 * C), lambda i: (0, 0)),            # w_even
                pl.BlockSpec((2 * C, 2 * C), lambda i: (0, 0)),            # w_odd
                pl.BlockSpec((1, 2 * C), lambda i: (0, 0)),                # bias (f32)
            ],
            out_specs=pl.BlockSpec((TR * Wh, 2 * C), lambda i: (i, 0)),    # lane-dense
        ),
        compiler_params=pltpu.CompilerParams(
            dimension_semantics=("parallel",),   # shards grid steps over v7x's 2 TCs
            vmem_limit_bytes=vmem_limit,
        ),
    )(x4, w_even, w_odd, bias)

    return out.reshape(B, (H // 2) * Wh, 2 * C)


def _reference_forward(x, gamma, beta, weight, input_resolution, eps=1e-5):
    """Pure-JAX reference matching the PyTorch module (f32, highest precision)."""
    H, W = input_resolution
    B, L, C = x.shape
    xg = x.astype(jnp.float32).reshape(B, H, W, C)
    x0 = xg[:, 0::2, 0::2, :]
    x1 = xg[:, 1::2, 0::2, :]
    x2 = xg[:, 0::2, 1::2, :]
    x3 = xg[:, 1::2, 1::2, :]
    xm = jnp.concatenate([x0, x1, x2, x3], axis=-1).reshape(B, -1, 4 * C)
    mean = jnp.mean(xm, axis=-1, keepdims=True)
    var = jnp.mean((xm - mean) ** 2, axis=-1, keepdims=True)
    xn = (xm - mean) / jnp.sqrt(var + eps) * gamma + beta
    return jnp.einsum("bnk,ok->bno", xn, weight.astype(jnp.float32),
                      precision=jax.lax.Precision.HIGHEST)


if __name__ == "__main__":
    # Small shapes: B=2, H=W=16, dim=C=32 -> x: (2, 256, 32), out: (2, 64, 64)
    B, H, W, C = 2, 16, 16, 32
    key = jax.random.PRNGKey(0)
    kx, kg, kb, kw = jax.random.split(key, 4)

    x = jax.random.normal(kx, (B, H * W, C), dtype=jnp.float32)
    # Parameters:  norm = nn.LayerNorm(4C) -> gamma/beta (4C,)
    #              reduction = nn.Linear(4C, 2C, bias=False) -> weight (2C, 4C)
    gamma = 1.0 + 0.1 * jax.random.normal(kg, (4 * C,), dtype=jnp.float32)
    beta = 0.1 * jax.random.normal(kb, (4 * C,), dtype=jnp.float32)
    weight = jax.random.normal(kw, (2 * C, 4 * C), dtype=jnp.float32) / math.sqrt(4.0 * C)

    fwd = jax.jit(functools.partial(patch_merging_forward, input_resolution=(H, W)))
    ref = _reference_forward(x, gamma, beta, weight, (H, W))

    # f32 activations / f32 weights.
    w_e, w_o, bias = prepare_patch_merging_params(gamma, beta, weight)
    out = jax.block_until_ready(fwd(x, w_e, w_o, bias))
    assert out.shape == (B, (H // 2) * (W // 2), 2 * C), out.shape
    assert jnp.allclose(out, ref, atol=2e-2, rtol=2e-2), "mismatch vs reference (f32)"

    # bf16 activations + bf16 weights (HBM/MXU-friendly path, f32 LN stats & accum).
    w_e_b, w_o_b, bias_b = prepare_patch_merging_params(gamma, beta,
                                                        weight.astype(jnp.bfloat16))
    out_b = jax.block_until_ready(fwd(x.astype(jnp.bfloat16), w_e_b, w_o_b, bias_b))
    assert out_b.dtype == jnp.bfloat16
    assert jnp.allclose(out_b.astype(jnp.float32), ref, atol=1.5e-1, rtol=1e-1), \
        "mismatch vs reference (bf16)"

    print("KERNEL_OK")
</pallas_src>

<mosaic_0001>
module attributes {stable_mosaic.version = 11 : i64} {
  func.func @_patch_merge_kernel(%arg0: i32, %arg1: memref<8x2x8x64xf32, #tpu.memory_space<vmem>>, %arg2: memref<64x64xf32, #tpu.memory_space<vmem>>, %arg3: memref<64x64xf32, #tpu.memory_space<vmem>>, %arg4: memref<1x64xf32, #tpu.memory_space<vmem>>, %arg5: memref<64x64xf32, #tpu.memory_space<vmem>>) attributes {dimension_semantics = [#tpu.dimension_semantics<parallel>], iteration_bounds = array<i64: 2>, scalar_prefetch = 0 : i64, scratch_operands = 0 : i64, tpu.core_type = #tpu.core_type<tc>, window_params = [{transform_indices = @transform_0, window_bounds = array<i64: 8, 2, 8, 64>}, {pipeline_mode = #tpu.pipeline_mode<synchronous>, transform_indices = @transform_1, window_bounds = array<i64: 64, 64>}, {pipeline_mode = #tpu.pipeline_mode<synchronous>, transform_indices = @transform_2, window_bounds = array<i64: 64, 64>}, {pipeline_mode = #tpu.pipeline_mode<synchronous>, transform_indices = @transform_3, window_bounds = array<i64: 1, 64>}, {transform_indices = @transform_4, window_bounds = array<i64: 64, 64>}]} {
    %c0 = arith.constant 0 : index
    %c0_0 = arith.constant 0 : index
    %c0_1 = arith.constant 0 : index
    %c0_2 = arith.constant 0 : index
    %0 = vector.load %arg1[%c0, %c0_0, %c0_1, %c0_2] : memref<8x2x8x64xf32, #tpu.memory_space<vmem>>, vector<8x2x8x64xf32>
    %1 = vector.extract_strided_slice %0 {offsets = [0, 0, 0, 0], sizes = [8, 1, 8, 64], strides = [1, 1, 1, 1]} : vector<8x2x8x64xf32> to vector<8x1x8x64xf32>
    %2 = vector.shape_cast %1 : vector<8x1x8x64xf32> to vector<8x8x64xf32>
    %3 = vector.shape_cast %2 : vector<8x8x64xf32> to vector<64x64xf32>
    %4 = vector.extract_strided_slice %0 {offsets = [0, 1, 0, 0], sizes = [8, 1, 8, 64], strides = [1, 1, 1, 1]} : vector<8x2x8x64xf32> to vector<8x1x8x64xf32>
    %5 = vector.shape_cast %4 : vector<8x1x8x64xf32> to vector<8x8x64xf32>
    %6 = vector.shape_cast %5 : vector<8x8x64xf32> to vector<64x64xf32>
    %cst = arith.constant dense<0.000000e+00> : vector<64xf32>
    %7 = vector.multi_reduction <add>, %3, %cst [1] : vector<64x64xf32> to vector<64xf32>
    %8 = vector.shape_cast %7 : vector<64xf32> to vector<64x1xf32>
    %cst_3 = arith.constant dense<0.000000e+00> : vector<64xf32>
    %9 = vector.multi_reduction <add>, %6, %cst_3 [1] : vector<64x64xf32> to vector<64xf32>
    %10 = vector.shape_cast %9 : vector<64xf32> to vector<64x1xf32>
    %11 = arith.addf %8, %10 : vector<64x1xf32>
    %12 = arith.mulf %3, %3 : vector<64x64xf32>
    %cst_4 = arith.constant dense<0.000000e+00> : vector<64xf32>
    %13 = vector.multi_reduction <add>, %12, %cst_4 [1] : vector<64x64xf32> to vector<64xf32>
    %14 = vector.shape_cast %13 : vector<64xf32> to vector<64x1xf32>
    %15 = arith.mulf %6, %6 : vector<64x64xf32>
    %cst_5 = arith.constant dense<0.000000e+00> : vector<64xf32>
    %16 = vector.multi_reduction <add>, %15, %cst_5 [1] : vector<64x64xf32> to vector<64xf32>
    %17 = vector.shape_cast %16 : vector<64xf32> to vector<64x1xf32>
    %18 = arith.addf %14, %17 : vector<64x1xf32>
    %cst_6 = arith.constant 7.812500e-03 : f32
    %19 = vector.broadcast %cst_6 : f32 to vector<64x1xf32>
    %20 = arith.mulf %11, %19 : vector<64x1xf32>
    %cst_7 = arith.constant 7.812500e-03 : f32
    %21 = vector.broadcast %cst_7 : f32 to vector<64x1xf32>
    %22 = arith.mulf %18, %21 : vector<64x1xf32>
    %23 = arith.mulf %20, %20 : vector<64x1xf32>
    %24 = arith.subf %22, %23 : vector<64x1xf32>
    %cst_8 = arith.constant 0.000000e+00 : f32
    %25 = vector.broadcast %cst_8 : f32 to vector<64x1xf32>
    %26 = arith.maximumf %24, %25 : vector<64x1xf32>
    %cst_9 = arith.constant 9.99999974E-6 : f32
    %27 = vector.broadcast %cst_9 : f32 to vector<64x1xf32>
    %28 = arith.addf %26, %27 : vector<64x1xf32>
    %29 = math.rsqrt %28 : vector<64x1xf32>
    %c0_10 = arith.constant 0 : index
    %c0_11 = arith.constant 0 : index
    %30 = vector.load %arg2[%c0_10, %c0_11] : memref<64x64xf32, #tpu.memory_space<vmem>>, vector<64x64xf32>
    %c0_12 = arith.constant 0 : index
    %c0_13 = arith.constant 0 : index
    %31 = vector.load %arg3[%c0_12, %c0_13] : memref<64x64xf32, #tpu.memory_space<vmem>>, vector<64x64xf32>
    %32 = vector.broadcast %20 : vector<64x1xf32> to vector<64x64xf32>
    %33 = arith.subf %3, %32 : vector<64x64xf32>
    %cst_14 = arith.constant dense<0.000000e+00> : vector<64x64xf32>
    %34 = tpu.matmul %33, %30, %cst_14 {dimension_numbers = #tpu.dot_dimension_numbers<[1], [0], [0], [1], [0, 0, 1, 1], [], []>} : vector<64x64xf32>, vector<64x64xf32>, vector<64x64xf32> -> vector<64x64xf32>
    %35 = vector.broadcast %20 : vector<64x1xf32> to vector<64x64xf32>
    %36 = arith.subf %6, %35 : vector<64x64xf32>
    %cst_15 = arith.constant dense<0.000000e+00> : vector<64x64xf32>
    %37 = tpu.matmul %36, %31, %cst_15 {dimension_numbers = #tpu.dot_dimension_numbers<[1], [0], [0], [1], [0, 0, 1, 1], [], []>} : vector<64x64xf32>, vector<64x64xf32>, vector<64x64xf32> -> vector<64x64xf32>
    %38 = arith.addf %34, %37 : vector<64x64xf32>
    %39 = vector.broadcast %29 : vector<64x1xf32> to vector<64x64xf32>
    %40 = arith.mulf %38, %39 : vector<64x64xf32>
    %c0_16 = arith.constant 0 : index
    %c0_17 = arith.constant 0 : index
    %41 = vector.load %arg4[%c0_16, %c0_17] : memref<1x64xf32, #tpu.memory_space<vmem>>, vector<1x64xf32>
    %42 = vector.broadcast %41 : vector<1x64xf32> to vector<64x64xf32>
    %43 = arith.addf %40, %42 : vector<64x64xf32>
    %c0_18 = arith.constant 0 : index
    %c0_19 = arith.constant 0 : index
    %44 = vector.load %arg5[%c0_18, %c0_19] : memref<64x64xf32, #tpu.memory_space<vmem>>, vector<64x64xf32>
    tpu.vector_store %arg5[%c0_18, %c0_19], %43 {strides = array<i32>} : memref<64x64xf32, #tpu.memory_space<vmem>>, vector<64x64xf32>,
    return
  }
  func.func @transform_0(%arg0: i32) -> (i32, i32, i32, i32) {
    %c0_i32 = arith.constant 0 : i32
    %c0_i32_0 = arith.constant 0 : i32
    %c0_i32_1 = arith.constant 0 : i32
    %c0_i32_2 = arith.constant 0 : i32
    return %arg0, %c0_i32, %c0_i32_0, %c0_i32_1 : i32, i32, i32, i32
  }
  func.func @transform_1(%arg0: i32) -> (i32, i32) {
    %c0_i32 = arith.constant 0 : i32
    %c0_i32_0 = arith.constant 0 : i32
    %c0_i32_1 = arith.constant 0 : i32
    return %c0_i32, %c0_i32_0 : i32, i32
  }
  func.func @transform_2(%arg0: i32) -> (i32, i32) {
    %c0_i32 = arith.constant 0 : i32
    %c0_i32_0 = arith.constant 0 : i32
    %c0_i32_1 = arith.constant 0 : i32
    return %c0_i32, %c0_i32_0 : i32, i32
  }
  func.func @transform_3(%arg0: i32) -> (i32, i32) {
    %c0_i32 = arith.constant 0 : i32
    %c0_i32_0 = arith.constant 0 : i32
    %c0_i32_1 = arith.constant 0 : i32
    return %c0_i32, %c0_i32_0 : i32, i32
  }
  func.func @transform_4(%arg0: i32) -> (i32, i32) {
    %c0_i32 = arith.constant 0 : i32
    %c0_i32_0 = arith.constant 0 : i32
    return %arg0, %c0_i32 : i32, i32
  }
}

</mosaic_0001>

<llo_original>
// kernel: patch_merging_forward.1
$region0: #{patch_merging_forward.1}
  #allocation0 [shape = 'u32[]', space=smem, size = 0x4, offset = 0x4, fixed_abs, tag = 'smem constant byte address 0x4 - core index']
  #allocation1 [shape = 'u32[72,128]{1,0:T(1,128)}', space=vmem, size = 0x9000, scoped, tag = 'internal scratch']
  %s0 = inlined_call_operand.vmem [shape: f32[16,2,8,64], index: 0, kind: input, shape index: {}]
  %s1 = inlined_call_operand.vmem [shape: f32[64,64], index: 1, kind: input, shape index: {}]
  %s2 = inlined_call_operand.vmem [shape: f32[64,64], index: 2, kind: input, shape index: {}]
  %s3 = inlined_call_operand.vmem [shape: f32[1,64], index: 3, kind: input, shape index: {}]
  %s4 = inlined_call_operand.hbm [shape: f32[128,64], index: 4, kind: output, shape index: {}]
  %s5 = sld [smem:[#allocation0]]
  $region49: #{patch_merging_forward.1} parent=0
    _
  %s7 = ssub.s32 1, %s5
  %s8 = scalar_select 0, %s7, %s5
  $region1: #{patch_merging_forward.1} parent=0
    #allocation2 [shape = 'u8[65536]{0}', space=vmem, size = 0x10000, scoped, tag = 'output window, operand 0']
    #allocation3 [shape = 's32[2]{0}', space=sflag, size = 0x8, scoped, tag = 'scoped memory for patch_merging_forward.1']
    %9 = vsyncpa [#allocation3], 0
    %s10 = scalar_lea.sflag [#allocation3], 1
    %11 = vsyncpa %s10, 0
    loop: start=0, step=1, limit=4
    $region2: #{patch_merging_forward.1} parent=1 // loop_pre_header
      _
    $region3: #{patch_merging_forward.1} parent=1 // loop_header
      %s13 = sphi 0, %s17
      %p14 = scmp.ge.s32.totalorder %s13, 4
      %s23 = sphi 0, %s25
      %s26 = sphi 0, %s23
      %s27 = sphi 0, %s26
      %s43 = sphi 0, %s27
      %s47 = sphi 0, %s47
      %s49 = sphi 0, %s47
      %s50 = sphi 0, %s49
      %s64 = sphi 0, %s50
      %s68 = sphi 0, %s68
      %s70 = sphi 0, %s68
      %s71 = sphi 0, %s70
      %s85 = sphi 0, %s71
      %s89 = sphi 0, %s89
      %s91 = sphi 0, %s89
      %s92 = sphi 0, %s91
      %s106 = sphi 0, %s92
      %s112 = sphi 0, %s114
      %s115 = sphi 0, %s112
      %s116 = sphi 0, %s115
      %s132 = sphi 0, %s116
    $region4: #{patch_merging_forward.1} parent=1 // loop_header_branch
      %16 = sbr.rel (%p14) target = $region8
    $region5: #{patch_merging_forward.1} parent=1 // loop_body
      %s18 = ssub.s32 %s13, 1
      %s19 = ssub.s32 %s13, 2
      %s20 = sadd.s32 %s13, 1
      %s21 = ssub.s32 %s13, %s20
      %p22 = scmp.eq.s32.totalorder %s21, 0
      %s24 = sadd.s32 %s23, 1
      %s25 = scalar_select %p22, %s23, %s24
      %p28 = pneg %p22
      %p29 = scmp.eq.s32.totalorder %s13, 1
      %p30 = por %p28, %p29
      %p31 = scmp.ne.s32.totalorder %s23, %s26
      %p32 = scmp.eq.s32.totalorder %s13, 0
      %p33 = por %p31, %p32
      %p34 = scmp.ne.s32.totalorder %s23, %s26
      %p35 = scmp.eq.s32.totalorder %s18, 1
      %p36 = por %p34, %p35
      %p37 = scmp.ne.s32.totalorder %s26, %s27
      %p38 = scmp.eq.s32.totalorder %s18, 0
      %p39 = por %p37, %p38
      %p40 = scmp.ne.s32.totalorder %s26, %s27
      %p41 = scmp.eq.s32.totalorder %s19, 1
      %p42 = por %p40, %p41
      %p44 = scmp.ne.s32.totalorder %s27, %s43
      %p45 = scmp.eq.s32.totalorder %s19, 0
      %p46 = por %p44, %p45
      %s48 = sadd.s32 %s47, 1
      %p51 = scmp.eq.s32.totalorder %s13, 1
      %p52 = scmp.ne.s32.totalorder %s47, %s49
      %p53 = scmp.eq.s32.totalorder %s13, 0
      %p54 = por %p52, %p53
      %p55 = scmp.ne.s32.totalorder %s47, %s49
      %p56 = scmp.eq.s32.totalorder %s18, 1
      %p57 = por %p55, %p56
      %p58 = scmp.ne.s32.totalorder %s49, %s50
      %p59 = scmp.eq.s32.totalorder %s18, 0
      %p60 = por %p58, %p59
      %p61 = scmp.ne.s32.totalorder %s49, %s50
      %p62 = scmp.eq.s32.totalorder %s19, 1
      %p63 = por %p61, %p62
      %p65 = scmp.ne.s32.totalorder %s50, %s64
      %p66 = scmp.eq.s32.totalorder %s19, 0
      %p67 = por %p65, %p66
      %s69 = sadd.s32 %s68, 1
      %p72 = scmp.eq.s32.totalorder %s13, 1
      %p73 = scmp.ne.s32.totalorder %s68, %s70
      %p74 = scmp.eq.s32.totalorder %s13, 0
      %p75 = por %p73, %p74
      %p76 = scmp.ne.s32.totalorder %s68, %s70
      %p77 = scmp.eq.s32.totalorder %s18, 1
      %p78 = por %p76, %p77
      %p79 = scmp.ne.s32.totalorder %s70, %s71
      %p80 = scmp.eq.s32.totalorder %s18, 0
      %p81 = por %p79, %p80
      %p82 = scmp.ne.s32.totalorder %s70, %s71
      %p83 = scmp.eq.s32.totalorder %s19, 1
      %p84 = por %p82, %p83
      %p86 = scmp.ne.s32.totalorder %s71, %s85
      %p87 = scmp.eq.s32.totalorder %s19, 0
      %p88 = por %p86, %p87
      %s90 = sadd.s32 %s89, 1
      %p93 = scmp.eq.s32.totalorder %s13, 1
      %p94 = scmp.ne.s32.totalorder %s89, %s91
      %p95 = scmp.eq.s32.totalorder %s13, 0
      %p96 = por %p94, %p95
      %p97 = scmp.ne.s32.totalorder %s89, %s91
      %p98 = scmp.eq.s32.totalorder %s18, 1
      %p99 = por %p97, %p98
      %p100 = scmp.ne.s32.totalorder %s91, %s92
      %p101 = scmp.eq.s32.totalorder %s18, 0
      %p102 = por %p100, %p101
      %p103 = scmp.ne.s32.totalorder %s91, %s92
      %p104 = scmp.eq.s32.totalorder %s19, 1
      %p105 = por %p103, %p104
      %p107 = scmp.ne.s32.totalorder %s92, %s106
      %p108 = scmp.eq.s32.totalorder %s19, 0
      %p109 = por %p107, %p108
      %s110 = ssub.s32 %s13, %s20
      %p111 = scmp.eq.s32.totalorder %s110, 0
      %s113 = sadd.s32 %s112, 1
      %s114 = scalar_select %p111, %s112, %s113
      %p117 = pneg %p111
      %p118 = scmp.eq.s32.totalorder %s13, 1
      %p119 = por %p117, %p118
      %p120 = scmp.ne.s32.totalorder %s112, %s115
      %p121 = scmp.eq.s32.totalorder %s13, 0
      %p122 = por %p120, %p121
      %p123 = scmp.ne.s32.totalorder %s112, %s115
      %p124 = scmp.eq.s32.totalorder %s18, 1
      %p125 = por %p123, %p124
      %p126 = scmp.ne.s32.totalorder %s115, %s116
      %p127 = scmp.eq.s32.totalorder %s18, 0
      %p128 = por %p126, %p127
      %p129 = scmp.ne.s32.totalorder %s115, %s116
      %p130 = scmp.eq.s32.totalorder %s19, 1
      %p131 = por %p129, %p130
      %p133 = scmp.ne.s32.totalorder %s116, %s132
      %p134 = scmp.eq.s32.totalorder %s19, 0
      %p135 = por %p133, %p134
      %p136 = scmp.le.s32.totalorder 1, %s13
      %p137 = scmp.lt.s32.totalorder %s13, 3
      %p138 = pnand %p136, %p137
      %p139 = pneg %p138
      // Predicated region
      $region9: #{patch_merging_forward.1} parent=5 // pred_check
        _
      $region10: #{patch_merging_forward.1} parent=5 // pred_check_branch
        %141 = sbr.rel (%p138) target = $region12
      $region11: #{patch_merging_forward.1} parent=5 // pred_region
        %s142 = ssub.s32 %s13, 1
        // Predicated region
        $region13: #{patch_merging_forward.1} parent=11 // pred_check
          %p143 = pneg %p60
        $region14: #{patch_merging_forward.1} parent=11 // pred_check_branch
          %145 = sbr.rel (%p143) target = $region16
        $region15: #{patch_merging_forward.1} parent=11 // pred_region
          _
        $region16: #{patch_merging_forward.1} parent=11 // pred_fallthru
          _
        // Predicated region
        $region17: #{patch_merging_forward.1} parent=11 // pred_check
          %p146 = pneg %p81
        $region18: #{patch_merging_forward.1} parent=11 // pred_check_branch
          %148 = sbr.rel (%p146) target = $region20
        $region19: #{patch_merging_forward.1} parent=11 // pred_region
          _
        $region20: #{patch_merging_forward.1} parent=11 // pred_fallthru
          _
        // Predicated region
        $region21: #{patch_merging_forward.1} parent=11 // pred_check
          %p149 = pneg %p102
        $region22: #{patch_merging_forward.1} parent=11 // pred_check_branch
          %151 = sbr.rel (%p149) target = $region24
        $region23: #{patch_merging_forward.1} parent=11 // pred_region
          _
        $region24: #{patch_merging_forward.1} parent=11 // pred_fallthru
          _
      $region12: #{patch_merging_forward.1} parent=5 // pred_fallthru
        _
      %p152 = scmp.lt.s32.totalorder %s13, 2
      // Predicated region
      $region25: #{patch_merging_forward.1} parent=5 // pred_check
        %p153 = pneg %p152
      $region26: #{patch_merging_forward.1} parent=5 // pred_check_branch
        %155 = sbr.rel (%p153) target = $region28
      $region27: #{patch_merging_forward.1} parent=5 // pred_region
        // Predicated region
        $region29: #{patch_merging_forward.1} parent=27 // pred_check
          %p156 = pneg %p33
        $region30: #{patch_merging_forward.1} parent=27 // pred_check_branch
          %158 = sbr.rel (%p156) target = $region32
        $region31: #{patch_merging_forward.1} parent=27 // pred_region
          %s159 = smul.u32 8, %s13
          %p160 = scmp.lt.s32.totalorder %s159, 15
          %s161 = scalar_select %p160, %s159, 15
          %s162 = smul.addr %s161, 2
          %s163 = smul.addr %s162, 8
          %s164 = scalar_lea.vmem %s0, %s163
          %s165 = smul.u32 8, %s13
        $region32: #{patch_merging_forward.1} parent=27 // pred_fallthru
          _
      $region28: #{patch_merging_forward.1} parent=5 // pred_fallthru
        _
      %p166 = scmp.le.s32.totalorder 1, %s13
      %p167 = scmp.lt.s32.totalorder %s13, 3
      %p168 = pnand %p166, %p167
      %p169 = pneg %p168
      // Predicated region
      $region33: #{patch_merging_forward.1} parent=5 // pred_check
        _
      $region34: #{patch_merging_forward.1} parent=5 // pred_check_branch
        %171 = sbr.rel (%p168) target = $region36
      $region35: #{patch_merging_forward.1} parent=5 // pred_region
        %s172 = ssub.s32 %s13, 1
        %s173 = smul.u32 8, %s18
        %p174 = scmp.lt.s32.totalorder %s173, 15
        %s175 = scalar_select %p174, %s173, 15
        %s176 = smul.addr %s175, 2
        %s177 = smul.addr %s176, 8
        %s178 = scalar_lea.vmem %s0, %s177
        %p179 = pneg %p39
        %p180 = pneg %p36
        %p181 = pneg %p60
        %p182 = pneg %p57
        %p183 = pneg %p81
        %p184 = pneg %p78
        %p185 = pneg %p102
        %p186 = pneg %p99
        %p187 = pneg %p128
        %p188 = pneg %p125
        %s189 = sand.u32 %s115, 1
        %s190 = scalar_lea.sflag [#allocation3], %s189
        %s191 = sand.u32 %s115, 1
        %s192 = smul.addr %s191, 64
        %s193 = scalar_lea.vmem [#allocation2], %s192
        %s194 = smul.u32 8, %s18
        %p195 = scmp.lt.s32.totalorder %s194, 15
        %s196 = scalar_select %p195, %s194, 15
        %s197 = smul.addr %s196, 2
        %s198 = smul.addr %s197, 8
        %s199 = scalar_lea.vmem %s0, %s198
        %s200 = smul.u32 8, %s18
        %s201 = smul.u32 8, %s18
        %v202 = vld [vmem:[%s199] sm:$0xff]
        %v203 = vld [vmem:[%s199 + $0x8] sm:$0xff]
        %v204 = vld [vmem:[%s199 + $0x10] sm:$0xff]
        %v205 = vld [vmem:[%s199 + $0x18] sm:$0xff]
        %v206 = vld [vmem:[%s199 + $0x20] sm:$0xff]
        %v207 = vld [vmem:[%s199 + $0x28] sm:$0xff]
        %v208 = vld [vmem:[%s199 + $0x30] sm:$0xff]
        %v209 = vld [vmem:[%s199 + $0x38] sm:$0xff]
        %v210 = vld [vmem:[%s199 + $0x40] sm:$0xff]
        %v211 = vld [vmem:[%s199 + $0x48] sm:$0xff]
        %v212 = vld [vmem:[%s199 + $0x50] sm:$0xff]
        %v213 = vld [vmem:[%s199 + $0x58] sm:$0xff]
        %v214 = vld [vmem:[%s199 + $0x60] sm:$0xff]
        %v215 = vld [vmem:[%s199 + $0x68] sm:$0xff]
        %v216 = vld [vmem:[%s199 + $0x70] sm:$0xff]
        %v217 = vld [vmem:[%s199 + $0x78] sm:$0xff]
        %vm218 = vcmask 523264
        %v219 = vsel %vm218, %v202, 0.0
        %220 = vadd.xlane.f32.xlu0 %v219
        %v221 = vpop.xlane.xlu0 %220
        %v222 = vsel %vm218, %v204, 0.0
        %223 = vadd.xlane.f32.xlu0 %v222
        %v224 = vpop.xlane.xlu0 %223
        %v225 = vsel %vm218, %v206, 0.0
        %226 = vadd.xlane.f32.xlu0 %v225
        %v227 = vpop.xlane.xlu0 %226
        %v228 = vsel %vm218, %v208, 0.0
        %229 = vadd.xlane.f32.xlu0 %v228
        %v230 = vpop.xlane.xlu0 %229
        %v231 = vsel %vm218, %v210, 0.0
        %232 = vadd.xlane.f32.xlu0 %v231
        %v233 = vpop.xlane.xlu0 %232
        %v234 = vsel %vm218, %v212, 0.0
        %235 = vadd.xlane.f32.xlu0 %v234
        %v236 = vpop.xlane.xlu0 %235
        %v237 = vsel %vm218, %v214, 0.0
        %238 = vadd.xlane.f32.xlu0 %v237
        %v239 = vpop.xlane.xlu0 %238
        %v240 = vsel %vm218, %v216, 0.0
        %241 = vadd.xlane.f32.xlu0 %v240
        %v242 = vpop.xlane.xlu0 %241
        %v243 = vsel %vm218, %v203, 0.0
        %244 = vadd.xlane.f32.xlu0 %v243
        %v245 = vpop.xlane.xlu0 %244
        %v246 = vsel %vm218, %v205, 0.0
        %247 = vadd.xlane.f32.xlu0 %v246
        %v248 = vpop.xlane.xlu0 %247
        %v249 = vsel %vm218, %v207, 0.0
        %250 = vadd.xlane.f32.xlu0 %v249
        %v251 = vpop.xlane.xlu0 %250
        %v252 = vsel %vm218, %v209, 0.0
        %253 = vadd.xlane.f32.xlu0 %v252
        %v254 = vpop.xlane.xlu0 %253
        %v255 = vsel %vm218, %v211, 0.0
        %256 = vadd.xlane.f32.xlu0 %v255
        %v257 = vpop.xlane.xlu0 %256
        %v258 = vsel %vm218, %v213, 0.0
        %259 = vadd.xlane.f32.xlu0 %v258
        %v260 = vpop.xlane.xlu0 %259
        %v261 = vsel %vm218, %v215, 0.0
        %262 = vadd.xlane.f32.xlu0 %v261
        %v263 = vpop.xlane.xlu0 %262
        %v264 = vsel %vm218, %v217, 0.0
        %265 = vadd.xlane.f32.xlu0 %v264
        %v266 = vpop.xlane.xlu0 %265
        %v267 = vadd.f32 %v221, %v245
        %v268 = vadd.f32 %v224, %v248
        %v269 = vadd.f32 %v227, %v251
        %v270 = vadd.f32 %v230, %v254
        %v271 = vadd.f32 %v233, %v257
        %v272 = vadd.f32 %v236, %v260
        %v273 = vadd.f32 %v239, %v263
        %v274 = vadd.f32 %v242, %v266
        %v275 = vmul.f32 %v202, %v202
        %v276 = vmul.f32 %v204, %v204
        %v277 = vmul.f32 %v206, %v206
        %v278 = vmul.f32 %v208, %v208
        %v279 = vmul.f32 %v210, %v210
        %v280 = vmul.f32 %v212, %v212
        %v281 = vmul.f32 %v214, %v214
        %v282 = vmul.f32 %v216, %v216
        %v283 = vsel %vm218, %v275, 0.0
        %284 = vadd.xlane.f32.xlu0 %v283
        %v285 = vpop.xlane.xlu0 %284
        %v286 = vsel %vm218, %v276, 0.0
        %287 = vadd.xlane.f32.xlu0 %v286
        %v288 = vpop.xlane.xlu0 %287
        %v289 = vsel %vm218, %v277, 0.0
        %290 = vadd.xlane.f32.xlu0 %v289
        %v291 = vpop.xlane.xlu0 %290
        %v292 = vsel %vm218, %v278, 0.0
        %293 = vadd.xlane.f32.xlu0 %v292
        %v294 = vpop.xlane.xlu0 %293
        %v295 = vsel %vm218, %v279, 0.0
        %296 = vadd.xlane.f32.xlu0 %v295
        %v297 = vpop.xlane.xlu0 %296
        %v298 = vsel %vm218, %v280, 0.0
        %299 = vadd.xlane.f32.xlu0 %v298
        %v300 = vpop.xlane.xlu0 %299
        %v301 = vsel %vm218, %v281, 0.0
        %302 = vadd.xlane.f32.xlu0 %v301
        %v303 = vpop.xlane.xlu0 %302
        %v304 = vsel %vm218, %v282, 0.0
        %305 = vadd.xlane.f32.xlu0 %v304
        %v306 = vpop.xlane.xlu0 %305
        %v307 = vmul.f32 %v203, %v203
        %v308 = vmul.f32 %v205, %v205
        %v309 = vmul.f32 %v207, %v207
        %v310 = vmul.f32 %v209, %v209
        %v311 = vmul.f32 %v211, %v211
        %v312 = vmul.f32 %v213, %v213
        %v313 = vmul.f32 %v215, %v215
        %v314 = vmul.f32 %v217, %v217
        %v315 = vsel %vm218, %v307, 0.0
        %316 = vadd.xlane.f32.xlu0 %v315
        %v317 = vpop.xlane.xlu0 %316
        %v318 = vsel %vm218, %v308, 0.0
        %319 = vadd.xlane.f32.xlu0 %v318
        %v320 = vpop.xlane.xlu0 %319
        %v321 = vsel %vm218, %v309, 0.0
        %322 = vadd.xlane.f32.xlu0 %v321
        %v323 = vpop.xlane.xlu0 %322
        %v324 = vsel %vm218, %v310, 0.0
        %325 = vadd.xlane.f32.xlu0 %v324
        %v326 = vpop.xlane.xlu0 %325
        %v327 = vsel %vm218, %v311, 0.0
        %328 = vadd.xlane.f32.xlu0 %v327
        %v329 = vpop.xlane.xlu0 %328
        %v330 = vsel %vm218, %v312, 0.0
        %331 = vadd.xlane.f32.xlu0 %v330
        %v332 = vpop.xlane.xlu0 %331
        %v333 = vsel %vm218, %v313, 0.0
        %334 = vadd.xlane.f32.xlu0 %v333
        %v335 = vpop.xlane.xlu0 %334
        %v336 = vsel %vm218, %v314, 0.0
        %337 = vadd.xlane.f32.xlu0 %v336
        %v338 = vpop.xlane.xlu0 %337
        %v339 = vadd.f32 %v285, %v317
        %v340 = vadd.f32 %v288, %v320
        %v341 = vadd.f32 %v291, %v323
        %v342 = vadd.f32 %v294, %v326
        %v343 = vadd.f32 %v297, %v329
        %v344 = vadd.f32 %v300, %v332
        %v345 = vadd.f32 %v303, %v335
        %v346 = vadd.f32 %v306, %v338
        %v347 = vmul.f32 %v267, 0.0078125
        %v348 = vmul.f32 %v268, 0.0078125
        %v349 = vmul.f32 %v269, 0.0078125
        %v350 = vmul.f32 %v270, 0.0078125
        %v351 = vmul.f32 %v271, 0.0078125
        %v352 = vmul.f32 %v272, 0.0078125
        %v353 = vmul.f32 %v273, 0.0078125
        %v354 = vmul.f32 %v274, 0.0078125
        %v355 = vmul.f32 %v339, 0.0078125
        %v356 = vmul.f32 %v340, 0.0078125
        %v357 = vmul.f32 %v341, 0.0078125
        %v358 = vmul.f32 %v342, 0.0078125
        %v359 = vmul.f32 %v343, 0.0078125
        %v360 = vmul.f32 %v344, 0.0078125
        %v361 = vmul.f32 %v345, 0.0078125
        %v362 = vmul.f32 %v346, 0.0078125
        %v363 = vmul.f32 %v347, %v347
        %v364 = vmul.f32 %v348, %v348
        %v365 = vmul.f32 %v349, %v349
        %v366 = vmul.f32 %v350, %v350
        %v367 = vmul.f32 %v351, %v351
        %v368 = vmul.f32 %v352, %v352
        %v369 = vmul.f32 %v353, %v353
        %v370 = vmul.f32 %v354, %v354
        %v371 = vsub.f32 %v355, %v363
        %v372 = vsub.f32 %v356, %v364
        %v373 = vsub.f32 %v357, %v365
        %v374 = vsub.f32 %v358, %v366
        %v375 = vsub.f32 %v359, %v367
        %v376 = vsub.f32 %v360, %v368
        %v377 = vsub.f32 %v361, %v369
        %v378 = vsub.f32 %v362, %v370
        %v379 = vmax.f32 %v371, 0.0
        %v380 = vmax.f32 %v372, 0.0
        %v381 = vmax.f32 %v373, 0.0
        %v382 = vmax.f32 %v374, 0.0
        %v383 = vmax.f32 %v375, 0.0
        %v384 = vmax.f32 %v376, 0.0
        %v385 = vmax.f32 %v377, 0.0
        %v386 = vmax.f32 %v378, 0.0
        %v387 = vadd.f32 %v379, 1e-05
        %v388 = vadd.f32 %v380, 1e-05
        %v389 = vadd.f32 %v381, 1e-05
        %v390 = vadd.f32 %v382, 1e-05
        %v391 = vadd.f32 %v383, 1e-05
        %v392 = vadd.f32 %v384, 1e-05
        %v393 = vadd.f32 %v385, 1e-05
        %v394 = vadd.f32 %v386, 1e-05
        %v395 = vrsqrt.pop %v387
        %v396 = vmul.f32 %v395, %v387
        %v397 = vmul.f32 %v396, %v395
        %v398 = vmul.f32 0.5, %v397
        %v399 = vsub.f32 1.5, %v398
        %v400 = vmul.f32 %v395, %v399
        %vm401 = vweird.f32 %v387
        %vm402 = vweird.f32 %v395
        %vm403 = vmor %vm401, %vm402
        %v404 = vsel %vm403, %v395, %v400
        %v405 = vrsqrt.pop %v388
        %v406 = vmul.f32 %v405, %v388
        %v407 = vmul.f32 %v406, %v405
        %v408 = vmul.f32 0.5, %v407
        %v409 = vsub.f32 1.5, %v408
        %v410 = vmul.f32 %v405, %v409
        %vm411 = vweird.f32 %v388
        %vm412 = vweird.f32 %v405
        %vm413 = vmor %vm411, %vm412
        %v414 = vsel %vm413, %v405, %v410
        %v415 = vrsqrt.pop %v389
        %v416 = vmul.f32 %v415, %v389
        %v417 = vmul.f32 %v416, %v415
        %v418 = vmul.f32 0.5, %v417
        %v419 = vsub.f32 1.5, %v418
        %v420 = vmul.f32 %v415, %v419
        %vm421 = vweird.f32 %v389
        %vm422 = vweird.f32 %v415
        %vm423 = vmor %vm421, %vm422
        %v424 = vsel %vm423, %v415, %v420
        %v425 = vrsqrt.pop %v390
        %v426 = vmul.f32 %v425, %v390
        %v427 = vmul.f32 %v426, %v425
        %v428 = vmul.f32 0.5, %v427
        %v429 = vsub.f32 1.5, %v428
        %v430 = vmul.f32 %v425, %v429
        %vm431 = vweird.f32 %v390
        %vm432 = vweird.f32 %v425
        %vm433 = vmor %vm431, %vm432
        %v434 = vsel %vm433, %v425, %v430
        %v435 = vrsqrt.pop %v391
        %v436 = vmul.f32 %v435, %v391
        %v437 = vmul.f32 %v436, %v435
        %v438 = vmul.f32 0.5, %v437
        %v439 = vsub.f32 1.5, %v438
        %v440 = vmul.f32 %v435, %v439
        %vm441 = vweird.f32 %v391
        %vm442 = vweird.f32 %v435
        %vm443 = vmor %vm441, %vm442
        %v444 = vsel %vm443, %v435, %v440
        %v445 = vrsqrt.pop %v392
        %v446 = vmul.f32 %v445, %v392
        %v447 = vmul.f32 %v446, %v445
        %v448 = vmul.f32 0.5, %v447
        %v449 = vsub.f32 1.5, %v448
        %v450 = vmul.f32 %v445, %v449
        %vm451 = vweird.f32 %v392
        %vm452 = vweird.f32 %v445
        %vm453 = vmor %vm451, %vm452
        %v454 = vsel %vm453, %v445, %v450
        %v455 = vrsqrt.pop %v393
        %v456 = vmul.f32 %v455, %v393
        %v457 = vmul.f32 %v456, %v455
        %v458 = vmul.f32 0.5, %v457
        %v459 = vsub.f32 1.5, %v458
        %v460 = vmul.f32 %v455, %v459
        %vm461 = vweird.f32 %v393
        %vm462 = vweird.f32 %v455
        %vm463 = vmor %vm461, %vm462
        %v464 = vsel %vm463, %v455, %v460
        %v465 = vrsqrt.pop %v394
        %v466 = vmul.f32 %v465, %v394
        %v467 = vmul.f32 %v466, %v465
        %v468 = vmul.f32 0.5, %v467
        %v469 = vsub.f32 1.5, %v468
        %v470 = vmul.f32 %v465, %v469
        %vm471 = vweird.f32 %v394
        %vm472 = vweird.f32 %v465
        %vm473 = vmor %vm471, %vm472
        %v474 = vsel %vm473, %v465, %v470
        %v475 = vld [vmem:[%s1] sm:$0xff]
        %v476 = vld [vmem:[%s1 + $0x8] sm:$0xff]
        %v477 = vld [vmem:[%s1 + $0x10] sm:$0xff]
        %v478 = vld [vmem:[%s1 + $0x18] sm:$0xff]
        %v479 = vld [vmem:[%s1 + $0x20] sm:$0xff]
        %v480 = vld [vmem:[%s1 + $0x28] sm:$0xff]
        %v481 = vld [vmem:[%s1 + $0x30] sm:$0xff]
        %v482 = vld [vmem:[%s1 + $0x38] sm:$0xff]
        %v483 = vld [vmem:[%s2] sm:$0xff]
        %v484 = vld [vmem:[%s2 + $0x8] sm:$0xff]
        %v485 = vld [vmem:[%s2 + $0x10] sm:$0xff]
        %v486 = vld [vmem:[%s2 + $0x18] sm:$0xff]
        %v487 = vld [vmem:[%s2 + $0x20] sm:$0xff]
        %v488 = vld [vmem:[%s2 + $0x28] sm:$0xff]
        %v489 = vld [vmem:[%s2 + $0x30] sm:$0xff]
        %v490 = vld [vmem:[%s2 + $0x38] sm:$0xff]
        %v491 = vsub.f32 %v202, %v347
        %v492 = vsub.f32 %v204, %v348
        %v493 = vsub.f32 %v206, %v349
        %v494 = vsub.f32 %v208, %v350
        %v495 = vsub.f32 %v210, %v351
        %v496 = vsub.f32 %v212, %v352
        %v497 = vsub.f32 %v214, %v353
        %v498 = vsub.f32 %v216, %v354
        %v499 = vsub.f32 %v203, %v347
        %v500 = vsub.f32 %v205, %v348
        %v501 = vsub.f32 %v207, %v349
        %v502 = vsub.f32 %v209, %v350
        %v503 = vsub.f32 %v211, %v351
        %v504 = vsub.f32 %v213, %v352
        %v505 = vsub.f32 %v215, %v353
        %v506 = vsub.f32 %v217, %v354
        %v508 = vsel %vm218, %v499, 0
        %v511 = vsel %vm218, %v500, 0
        %v514 = vsel %vm218, %v501, 0
        %v517 = vsel %vm218, %v502, 0
        %v520 = vsel %vm218, %v503, 0
        %v523 = vsel %vm218, %v504, 0
        %v526 = vsel %vm218, %v505, 0
        %v529 = vsel %vm218, %v506, 0
        %531 = vmatpush.msra.mxu0 0.0
        %532 = vmatpush.msra.mxu0 0.0
        %533 = vmatpush.msra.mxu0 0.0
        %534 = vmatpush.msra.mxu0 0.0
        %535 = vmatpush.msra.mxu0 0.0
        %536 = vmatpush.msra.mxu0 0.0
        %537 = vmatpush.msra.mxu0 0.0
        %538 = vmatpush.msra.mxu0 0.0
        %539 = vmatpush.msra.mxu0 %v490
        %540 = vmatpush.msra.mxu0 %v489
        %541 = vmatpush.msra.mxu0 %v488
        %542 = vmatpush.msra.mxu0 %v487
        %543 = vmatpush.msra.mxu0 %v486
        %544 = vmatpush.msra.mxu0 %v485
        %545 = vmatpush.msra.mxu0 %v484
        %546 = vmatpush.msra.mxu0 %v483
        %547 = vmatmul.f32.gmra.mxu0 %v508
        %v548 = vpop.f32.mrf.mxu0
        %v549 = vadd.f32 0.0, %v548
        %550 = vmatmul.f32.gmra.mxu0 %v511
        %v551 = vpop.f32.mrf.mxu0
        %v552 = vadd.f32 0.0, %v551
        %553 = vmatmul.f32.gmra.mxu0 %v514
        %v554 = vpop.f32.mrf.mxu0
        %v555 = vadd.f32 0.0, %v554
        %556 = vmatmul.f32.gmra.mxu0 %v517
        %v557 = vpop.f32.mrf.mxu0
        %v558 = vadd.f32 0.0, %v557
        %559 = vmatmul.f32.gmra.mxu0 %v520
        %v560 = vpop.f32.mrf.mxu0
        %v561 = vadd.f32 0.0, %v560
        %562 = vmatmul.f32.gmra.mxu0 %v523
        %v563 = vpop.f32.mrf.mxu0
        %v564 = vadd.f32 0.0, %v563
        %565 = vmatmul.f32.gmra.mxu0 %v526
        %v566 = vpop.f32.mrf.mxu0
        %v567 = vadd.f32 0.0, %v566
        %568 = vmatmul.f32.gmra.mxu0 %v529
        %v569 = vpop.f32.mrf.mxu0
        %v570 = vadd.f32 0.0, %v569
        %571 = vdwg.mxu0
        %v573 = vsel %vm218, %v491, 0
        %v576 = vsel %vm218, %v492, 0
        %v579 = vsel %vm218, %v493, 0
        %v582 = vsel %vm218, %v494, 0
        %v585 = vsel %vm218, %v495, 0
        %v588 = vsel %vm218, %v496, 0
        %v591 = vsel %vm218, %v497, 0
        %v594 = vsel %vm218, %v498, 0
        %596 = vmatpush.msra.mxu0 0.0
        %597 = vmatpush.msra.mxu0 0.0
        %598 = vmatpush.msra.mxu0 0.0
        %599 = vmatpush.msra.mxu0 0.0
        %600 = vmatpush.msra.mxu0 0.0
        %601 = vmatpush.msra.mxu0 0.0
        %602 = vmatpush.msra.mxu0 0.0
        %603 = vmatpush.msra.mxu0 0.0
        %604 = vmatpush.msra.mxu0 %v482
        %605 = vmatpush.msra.mxu0 %v481
        %606 = vmatpush.msra.mxu0 %v480
        %607 = vmatpush.msra.mxu0 %v479
        %608 = vmatpush.msra.mxu0 %v478
        %609 = vmatpush.msra.mxu0 %v477
        %610 = vmatpush.msra.mxu0 %v476
        %611 = vmatpush.msra.mxu0 %v475
        %612 = vmatmul.f32.gmra.mxu0 %v573
        %v613 = vpop.f32.mrf.mxu0
        %v614 = vadd.f32 %v549, %v613
        %615 = vmatmul.f32.gmra.mxu0 %v576
        %v616 = vpop.f32.mrf.mxu0
        %v617 = vadd.f32 %v552, %v616
        %618 = vmatmul.f32.gmra.mxu0 %v579
        %v619 = vpop.f32.mrf.mxu0
        %v620 = vadd.f32 %v555, %v619
        %621 = vmatmul.f32.gmra.mxu0 %v582
        %v622 = vpop.f32.mrf.mxu0
        %v623 = vadd.f32 %v558, %v622
        %624 = vmatmul.f32.gmra.mxu0 %v585
        %v625 = vpop.f32.mrf.mxu0
        %v626 = vadd.f32 %v561, %v625
        %627 = vmatmul.f32.gmra.mxu0 %v588
        %v628 = vpop.f32.mrf.mxu0
        %v629 = vadd.f32 %v564, %v628
        %630 = vmatmul.f32.gmra.mxu0 %v591
        %v631 = vpop.f32.mrf.mxu0
        %v632 = vadd.f32 %v567, %v631
        %633 = vmatmul.f32.gmra.mxu0 %v594
        %v634 = vpop.f32.mrf.mxu0
        %v635 = vadd.f32 %v570, %v634
        %636 = vdwg.mxu0
        %v637 = vmul.f32 %v614, %v404
        %v638 = vmul.f32 %v617, %v414
        %v639 = vmul.f32 %v620, %v424
        %v640 = vmul.f32 %v623, %v434
        %v641 = vmul.f32 %v626, %v444
        %v642 = vmul.f32 %v629, %v454
        %v643 = vmul.f32 %v632, %v464
        %v644 = vmul.f32 %v635, %v474
        %v645 = vld [vmem:[%s3] sm:$0x1]
        %v647 = vperm.slane %v645, 0
        %v649 = vadd.f32 %v637, %v647
        %v650 = vadd.f32 %v638, %v647
        %v651 = vadd.f32 %v639, %v647
        %v652 = vadd.f32 %v640, %v647
        %v653 = vadd.f32 %v641, %v647
        %v654 = vadd.f32 %v642, %v647
        %v655 = vadd.f32 %v643, %v647
        %v656 = vadd.f32 %v644, %v647
        %657 = vst.msk [vmem:[%s193] sm:$0xff] %vm218, %v649
        %658 = vst.msk [vmem:[%s193 + $0x8] sm:$0xff] %vm218, %v650
        %659 = vst.msk [vmem:[%s193 + $0x10] sm:$0xff] %vm218, %v651
        %660 = vst.msk [vmem:[%s193 + $0x18] sm:$0xff] %vm218, %v652
        %661 = vst.msk [vmem:[%s193 + $0x20] sm:$0xff] %vm218, %v653
        %662 = vst.msk [vmem:[%s193 + $0x28] sm:$0xff] %vm218, %v654
        %663 = vst.msk [vmem:[%s193 + $0x30] sm:$0xff] %vm218, %v655
        %664 = vst.msk [vmem:[%s193 + $0x38] sm:$0xff] %vm218, %v656
        %s665 = sand.u32 %s115, 1
        %s666 = scalar_lea.sflag [#allocation3], %s665
        %s667 = sand.u32 %s115, 1
        %s668 = smul.addr %s667, 64
        %s669 = scalar_lea.vmem [#allocation2], %s668
        // Predicated region
        $region37: #{patch_merging_forward.1} parent=35 // pred_check
          %p670 = pneg %p125
        $region38: #{patch_merging_forward.1} parent=35 // pred_check_branch
          %672 = sbr.rel (%p670) target = $region40
        $region39: #{patch_merging_forward.1} parent=35 // pred_region
          %s673 = smul.u32 8, %s18
          %675 = vsyncadd %s666, 0
          %s676 = smul.addr %s673, 8
          %s677 = scalar_lea.hbm %s4, %s676
          %s678 = sshll.u32 %s669, 4
          %s679 = int_to_ptr.vmem [resolvable:$true] %s678
          %s680 = sshll.u32 %s677, 4
          %s681 = int_to_ptr.hbm [resolvable:$true] %s680
          %686 = dma.vmem_to_hbm [thread:$0]  %s679, 1024, %s681, %s666, 128, 128, 8
        $region40: #{patch_merging_forward.1} parent=35 // pred_fallthru
          _
      $region36: #{patch_merging_forward.1} parent=5 // pred_fallthru
        _
      %p687 = scmp.le.s32.totalorder 2, %s13
      // Predicated region
      $region41: #{patch_merging_forward.1} parent=5 // pred_check
        %p688 = pneg %p687
      $region42: #{patch_merging_forward.1} parent=5 // pred_check_branch
        %690 = sbr.rel (%p688) target = $region44
      $region43: #{patch_merging_forward.1} parent=5 // pred_region
        %s691 = ssub.s32 %s13, 2
        // Predicated region
        $region45: #{patch_merging_forward.1} parent=43 // pred_check
          %p692 = pneg %p131
        $region46: #{patch_merging_forward.1} parent=43 // pred_check_branch
          %694 = sbr.rel (%p692) target = $region48
        $region47: #{patch_merging_forward.1} parent=43 // pred_region
          %s695 = sand.u32 %s116, 1
          %s696 = scalar_lea.sflag [#allocation3], %s695
          %s697 = sand.u32 %s116, 1
          %s698 = smul.addr %s697, 64
          %s699 = scalar_lea.vmem [#allocation2], %s698
          %701 = dma.done %s696, 1024
        $region48: #{patch_merging_forward.1} parent=43 // pred_fallthru
          _
      $region44: #{patch_merging_forward.1} parent=5 // pred_fallthru
        _
    $region6: #{patch_merging_forward.1} parent=1 // loop_footer
      %s17 = sadd.s32 1, %s13
    $region7: #{patch_merging_forward.1} parent=1 // loop_footer_branch
      %12 = sbr.rel target = $region3
    $region8: #{patch_merging_forward.1} parent=1 // loop_exit
      _
    %702 = vsyncpa [#allocation3], 1
    %s703 = scalar_lea.sflag [#allocation3], 1
    %704 = vsyncpa %s703, 1

</llo_original>
